<compile_context>
chip_gen: v5e
topology: v5e:2x2
jax: 0.10.0
libtpu: 0.0.40
codegen_flags: <defaults>
</compile_context>

<pallas_src>
import jax
import jax.numpy as jnp
from jax.experimental import pallas as pl
from jax.experimental.pallas import tpu as pltpu


OBS_DIM = 5
HIDDEN = 128
N_ACTIONS = 6      # len(Action.ALL_ACTIONS); Overcooked-style 6-action stand-in
N_PAD = 128        # lane-dense padded width of w2 (MXU rhs only, never stored)
TILE_B_MAX = 8192  # ~16 MiB of double-buffered I/O + ~8 MiB intermediates at f32


def _round_up(a, m):
    return (a + m - 1) // m * m


def _cdiv(a, m):
    return -(-a // m)


def _policy_kernel(x_ref, w1_ref, b1_ref, w2_ref, b2_ref, out_ref):
    # Hidden layer: (TILE_B, obs_dim) @ (obs_dim, 128) + (1, 128), ReLU. f32 accum.
    h = jnp.dot(x_ref[...], w1_ref[...], preferred_element_type=jnp.float32)
    h = jnp.maximum(h + b1_ref[...], 0.0)
    # Output layer: (TILE_B, 128) @ (128, 128-padded). Only the first n_actions
    # columns are real; slice before the bias add / store so the HBM writeback
    # is n_actions wide, not 128.
    h = h.astype(w2_ref.dtype)  # no-op for f32; bf16 cast for the bf16 MXU path
    logits = jnp.dot(h, w2_ref[...], preferred_element_type=jnp.float32)
    n_out = out_ref.shape[-1]
    out_ref[...] = (logits[:, :n_out] + b2_ref[...]).astype(out_ref.dtype)


def prepare_params(w1, b1, w2, b2, *, matmul_dtype=jnp.float32):
    """Pad / reshape parameters once (outside the per-call hot path).

    w1: (obs_dim, hidden), b1: (hidden,), w2: (hidden, n_actions), b2: (n_actions,)
    Returns (w1, b1_2d, w2_padded_to_128_cols, b2_2d) ready for policy_forward.
    """
    hidden = w1.shape[1]
    n_actions = w2.shape[1]
    w2_p = jnp.zeros((hidden, N_PAD), jnp.float32).at[:, :n_actions].set(w2)
    return (
        jnp.asarray(w1, matmul_dtype),
        jnp.asarray(b1, jnp.float32).reshape(1, hidden),
        w2_p.astype(matmul_dtype),
        jnp.asarray(b2, jnp.float32).reshape(1, n_actions),
    )


def policy_forward(x, params, *, tile_b_max=TILE_B_MAX):
    """x: (B, obs_dim) -> logits: (B, n_actions) f32. `params` from prepare_params."""
    w1, b1, w2_p, b2 = params
    batch, obs_dim = x.shape
    hidden = w1.shape[1]
    n_actions = b2.shape[1]

    if x.dtype != w1.dtype:          # bf16 matmul path: cast activations too
        x = x.astype(w1.dtype)

    # --- batch tiling ---------------------------------------------------------
    # Sublane-align, then pick a tile that (a) fits tile_b_max and (b) yields at
    # least 2 grid steps for batches > 256 so v7x's two TensorCores both get work.
    b8 = _round_up(batch, 8)
    if b8 <= 256:
        tile_b = b8
    else:
        n_steps = max(2, _cdiv(b8, tile_b_max))
        tile_b = _round_up(_cdiv(b8, n_steps), 8)
    b_padded = _round_up(b8, tile_b)
    if b_padded != batch:
        # Padded rows compute relu(b1) @ w2 + b2 (garbage) and are sliced off below.
        x = jnp.pad(x, ((0, b_padded - batch), (0, 0)))
    grid = (b_padded // tile_b,)

    # Note: x has a narrow (obs_dim=5) minor dim; if its DMA ever dominates the
    # profile, store observations with obs_dim padded to 8 (or feature-major).

    flops = 2 * b_padded * obs_dim * hidden + 2 * b_padded * hidden * N_PAD
    bytes_accessed = (
        b_padded * obs_dim * x.dtype.itemsize            # x in
        + (obs_dim * hidden + hidden * N_PAD) * w1.dtype.itemsize   # w1, w2
        + (hidden + n_actions) * 4                       # b1, b2
        + b_padded * n_actions * 4                       # logits out
    )

    out = pl.pallas_call(
        _policy_kernel,
        out_shape=jax.ShapeDtypeStruct((b_padded, n_actions), jnp.float32),
        grid=grid,
        in_specs=[
            # x: tiled along batch (double-buffered by the pipeline)
            pl.BlockSpec((tile_b, obs_dim), lambda i: (i, 0)),
            # weights / biases: constant index_map -> VMEM-resident across steps
            pl.BlockSpec((obs_dim, hidden), lambda i: (0, 0)),
            pl.BlockSpec((1, hidden), lambda i: (0, 0)),
            pl.BlockSpec((hidden, N_PAD), lambda i: (0, 0)),
            pl.BlockSpec((1, n_actions), lambda i: (0, 0)),
        ],
        out_specs=pl.BlockSpec((tile_b, n_actions), lambda i: (i, 0)),
        compiler_params=pltpu.CompilerParams(
            dimension_semantics=("parallel",),
            vmem_limit_bytes=48 * 1024 * 1024,
        ),
        cost_estimate=pl.CostEstimate(
            flops=int(flops),
            transcendentals=0,
            bytes_accessed=int(bytes_accessed),
        ),
    )(x, w1, b1, w2_p, b2)

    # Strip batch padding (no column slice needed: output is already n_actions wide).
    return out[:batch] if b_padded != batch else out


def init_params(key):
    """Deterministic init mimicking torch.nn.Linear defaults (U(-1/sqrt(fan_in), +))."""
    k1, k2, k3, k4 = jax.random.split(key, 4)
    bound1 = 1.0 / (OBS_DIM ** 0.5)
    bound2 = 1.0 / (HIDDEN ** 0.5)
    w1 = jax.random.uniform(k1, (OBS_DIM, HIDDEN), jnp.float32, -bound1, bound1)
    b1 = jax.random.uniform(k2, (HIDDEN,), jnp.float32, -bound1, bound1)
    w2 = jax.random.uniform(k3, (HIDDEN, N_ACTIONS), jnp.float32, -bound2, bound2)
    b2 = jax.random.uniform(k4, (N_ACTIONS,), jnp.float32, -bound2, bound2)
    return w1, b1, w2, b2


if __name__ == "__main__":
    key = jax.random.PRNGKey(0)
    k_x, k_p = jax.random.split(key)

    w1, b1, w2, b2 = init_params(k_p)
    params = prepare_params(w1, b1, w2, b2)   # pad/arrange once, reuse per call

    # Small shapes consistent with the module (B=8 rollout slice), plus a
    # non-multiple-of-8 batch and a >256 batch to exercise padding + 2-step grid.
    for batch in (8, 37, 300):
        x = jax.random.normal(jax.random.fold_in(k_x, batch), (batch, OBS_DIM),
                              jnp.float32)

        logits = policy_forward(x, params)
        logits = jax.block_until_ready(logits)

        # Pure-JAX reference check of forward semantics.
        ref = jnp.maximum(x @ w1 + b1, 0.0) @ w2 + b2
        assert logits.shape == (batch, N_ACTIONS)
        assert jnp.allclose(logits, ref, atol=1e-5, rtol=1e-5)

    print("KERNEL_OK")
</pallas_src>

<mosaic_0001>
module attributes {stable_mosaic.version = 11 : i64} {
  func.func @_policy_kernel(%arg0: i32, %arg1: memref<8x5xf32, #tpu.memory_space<vmem>>, %arg2: memref<5x128xf32, #tpu.memory_space<vmem>>, %arg3: memref<1x128xf32, #tpu.memory_space<vmem>>, %arg4: memref<128x128xf32, #tpu.memory_space<vmem>>, %arg5: memref<1x6xf32, #tpu.memory_space<vmem>>, %arg6: memref<8x6xf32, #tpu.memory_space<vmem>>) attributes {dimension_semantics = [#tpu.dimension_semantics<parallel>], iteration_bounds = array<i64: 1>, scalar_prefetch = 0 : i64, scratch_operands = 0 : i64, tpu.core_type = #tpu.core_type<tc>, window_params = [{transform_indices = @transform_0, window_bounds = array<i64: 8, 5>}, {pipeline_mode = #tpu.pipeline_mode<synchronous>, transform_indices = @transform_1, window_bounds = array<i64: 5, 128>}, {pipeline_mode = #tpu.pipeline_mode<synchronous>, transform_indices = @transform_2, window_bounds = array<i64: 1, 128>}, {pipeline_mode = #tpu.pipeline_mode<synchronous>, transform_indices = @transform_3, window_bounds = array<i64: 128, 128>}, {pipeline_mode = #tpu.pipeline_mode<synchronous>, transform_indices = @transform_4, window_bounds = array<i64: 1, 6>}, {transform_indices = @transform_5, window_bounds = array<i64: 8, 6>}]} {
    %c0 = arith.constant 0 : index
    %c0_0 = arith.constant 0 : index
    %0 = vector.load %arg1[%c0, %c0_0] : memref<8x5xf32, #tpu.memory_space<vmem>>, vector<8x5xf32>
    %c0_1 = arith.constant 0 : index
    %c0_2 = arith.constant 0 : index
    %1 = vector.load %arg2[%c0_1, %c0_2] : memref<5x128xf32, #tpu.memory_space<vmem>>, vector<5x128xf32>
    %cst = arith.constant dense<0.000000e+00> : vector<8x128xf32>
    %2 = tpu.matmul %0, %1, %cst {dimension_numbers = #tpu.dot_dimension_numbers<[1], [0], [0], [1], [0, 0, 1, 1], [], []>} : vector<8x5xf32>, vector<5x128xf32>, vector<8x128xf32> -> vector<8x128xf32>
    %c0_3 = arith.constant 0 : index
    %c0_4 = arith.constant 0 : index
    %3 = vector.load %arg3[%c0_3, %c0_4] : memref<1x128xf32, #tpu.memory_space<vmem>>, vector<1x128xf32>
    %4 = vector.broadcast %3 : vector<1x128xf32> to vector<8x128xf32>
    %5 = arith.addf %2, %4 : vector<8x128xf32>
    %cst_5 = arith.constant 0.000000e+00 : f32
    %6 = vector.broadcast %cst_5 : f32 to vector<8x128xf32>
    %7 = arith.maximumf %5, %6 : vector<8x128xf32>
    %c0_6 = arith.constant 0 : index
    %c0_7 = arith.constant 0 : index
    %8 = vector.load %arg4[%c0_6, %c0_7] : memref<128x128xf32, #tpu.memory_space<vmem>>, vector<128x128xf32>
    %cst_8 = arith.constant dense<0.000000e+00> : vector<8x128xf32>
    %9 = tpu.matmul %7, %8, %cst_8 {dimension_numbers = #tpu.dot_dimension_numbers<[1], [0], [0], [1], [0, 0, 1, 1], [], []>} : vector<8x128xf32>, vector<128x128xf32>, vector<8x128xf32> -> vector<8x128xf32>
    %10 = vector.extract_strided_slice %9 {offsets = [0, 0], sizes = [8, 6], strides = [1, 1]} : vector<8x128xf32> to vector<8x6xf32>
    %c0_9 = arith.constant 0 : index
    %c0_10 = arith.constant 0 : index
    %11 = vector.load %arg5[%c0_9, %c0_10] : memref<1x6xf32, #tpu.memory_space<vmem>>, vector<1x6xf32>
    %12 = vector.broadcast %11 : vector<1x6xf32> to vector<8x6xf32>
    %13 = arith.addf %10, %12 : vector<8x6xf32>
    %c0_11 = arith.constant 0 : index
    %c0_12 = arith.constant 0 : index
    %14 = vector.load %arg6[%c0_11, %c0_12] : memref<8x6xf32, #tpu.memory_space<vmem>>, vector<8x6xf32>
    tpu.vector_store %arg6[%c0_11, %c0_12], %13 {strides = array<i32>} : memref<8x6xf32, #tpu.memory_space<vmem>>, vector<8x6xf32>,
    return
  }
  func.func @transform_0(%arg0: i32) -> (i32, i32) {
    %c0_i32 = arith.constant 0 : i32
    %c0_i32_0 = arith.constant 0 : i32
    return %arg0, %c0_i32 : i32, i32
  }
  func.func @transform_1(%arg0: i32) -> (i32, i32) {
    %c0_i32 = arith.constant 0 : i32
    %c0_i32_0 = arith.constant 0 : i32
    %c0_i32_1 = arith.constant 0 : i32
    return %c0_i32, %c0_i32_0 : i32, i32
  }
  func.func @transform_2(%arg0: i32) -> (i32, i32) {
    %c0_i32 = arith.constant 0 : i32
    %c0_i32_0 = arith.constant 0 : i32
    %c0_i32_1 = arith.constant 0 : i32
    return %c0_i32, %c0_i32_0 : i32, i32
  }
  func.func @transform_3(%arg0: i32) -> (i32, i32) {
    %c0_i32 = arith.constant 0 : i32
    %c0_i32_0 = arith.constant 0 : i32
    %c0_i32_1 = arith.constant 0 : i32
    return %c0_i32, %c0_i32_0 : i32, i32
  }
  func.func @transform_4(%arg0: i32) -> (i32, i32) {
    %c0_i32 = arith.constant 0 : i32
    %c0_i32_0 = arith.constant 0 : i32
    %c0_i32_1 = arith.constant 0 : i32
    return %c0_i32, %c0_i32_0 : i32, i32
  }
  func.func @transform_5(%arg0: i32) -> (i32, i32) {
    %c0_i32 = arith.constant 0 : i32
    %c0_i32_0 = arith.constant 0 : i32
    return %arg0, %c0_i32 : i32, i32
  }
}

</mosaic_0001>

<llo_original>
// kernel: tpu_custom_call.1
$region0: #{tpu_custom_call.1}
  #allocation0 [shape = 'u32[]', space=smem, size = 0x4, offset = 0x4, fixed_abs, tag = 'smem constant byte address 0x4 - core index']
  #allocation1 [shape = 'u32[72,128]{1,0:T(1,128)}', space=vmem, size = 0x9000, scoped, tag = 'internal scratch']
  %s0 = inlined_call_operand.hbm [shape: f32[8,5], index: 0, kind: input, shape index: {}]
  %s1 = inlined_call_operand.hbm [shape: f32[5,128], index: 1, kind: input, shape index: {}]
  %s2 = inlined_call_operand.vmem [shape: f32[1,128], index: 2, kind: input, shape index: {}]
  %s3 = inlined_call_operand.hbm [shape: f32[128,128], index: 3, kind: input, shape index: {}]
  %s4 = inlined_call_operand.vmem [shape: f32[1,6], index: 4, kind: input, shape index: {}]
  %s5 = inlined_call_operand.hbm [shape: f32[8,6], index: 5, kind: output, shape index: {}]
  %s6 = sld [smem:[#allocation0]]
  $region42: #{tpu_custom_call.1} parent=0
    _
  %s8 = ssub.s32 1, %s6
  %s9 = scalar_select 0, %s8, %s6
  $region1: #{tpu_custom_call.1} parent=0
    #allocation2 [shape = 'u8[4096]{0}', space=vmem, size = 0x1000, scoped, tag = 'input window, operand 0, single buffered']
    #allocation3 [shape = 's32[1]{0}', space=sflag, size = 0x4, scoped, tag = 'scoped memory for tpu_custom_call.1']
    #allocation4 [shape = 's32[1]{0}', space=sflag, size = 0x4, scoped, tag = 'scoped memory for tpu_custom_call.1']
    #allocation5 [shape = 'u8[4096]{0}', space=vmem, size = 0x1000, scoped, tag = 'input window, operand 1, single buffered']
    #allocation6 [shape = 's32[1]{0}', space=sflag, size = 0x4, scoped, tag = 'scoped memory for tpu_custom_call.1']
    #allocation7 [shape = 'u8[65536]{0}', space=vmem, size = 0x10000, scoped, tag = 'input window, operand 3, single buffered']
    #allocation8 [shape = 'u8[4096]{0}', space=vmem, size = 0x1000, scoped, tag = 'output window, operand 0, single buffered']
    %10 = vsyncpa [#allocation3], 0
    %11 = vsyncpa [#allocation6], 0
    %12 = vsyncpa [#allocation4], 0
    // Predicated region
    $region2: #{tpu_custom_call.1} parent=1 // pred_check
      _
    $region3: #{tpu_custom_call.1} parent=1 // pred_check_branch
      %14 = sbr.rel (0) target = $region5
    $region4: #{tpu_custom_call.1} parent=1 // pred_region
      %16 = vsyncadd [#allocation3], 0
      %s18 = sshll.u32 %s0, 4
      %s19 = int_to_ptr.hbm [resolvable:$true] %s18
      %s20 = sshll.u32 [#allocation2], 4
      %s21 = int_to_ptr.vmem [resolvable:$true] %s20
      %23 = dma.hbm_to_vmem [thread:$0]  %s19, 128, %s21, [#allocation3]
    $region5: #{tpu_custom_call.1} parent=1 // pred_fallthru
      _
    // Predicated region
    $region6: #{tpu_custom_call.1} parent=1 // pred_check
      _
    $region7: #{tpu_custom_call.1} parent=1 // pred_check_branch
      %25 = sbr.rel (0) target = $region9
    $region8: #{tpu_custom_call.1} parent=1 // pred_region
      %27 = vsyncadd [#allocation6], 0
      %s29 = sshll.u32 %s1, 4
      %s30 = int_to_ptr.hbm [resolvable:$true] %s29
      %s31 = sshll.u32 [#allocation5], 4
      %s32 = int_to_ptr.vmem [resolvable:$true] %s31
      %34 = dma.hbm_to_vmem [thread:$0]  %s30, 128, %s32, [#allocation6]
    $region9: #{tpu_custom_call.1} parent=1 // pred_fallthru
      _
    // Predicated region
    $region10: #{tpu_custom_call.1} parent=1 // pred_check
      _
    $region11: #{tpu_custom_call.1} parent=1 // pred_check_branch
      %36 = sbr.rel (0) target = $region13
    $region12: #{tpu_custom_call.1} parent=1 // pred_region
      _
    $region13: #{tpu_custom_call.1} parent=1 // pred_fallthru
      _
    // Predicated region
    $region14: #{tpu_custom_call.1} parent=1 // pred_check
      _
    $region15: #{tpu_custom_call.1} parent=1 // pred_check_branch
      %38 = sbr.rel (0) target = $region17
    $region16: #{tpu_custom_call.1} parent=1 // pred_region
      %40 = vsyncadd [#allocation6], 0
      %s41 = sshll.u32 %s3, 4
      %s42 = int_to_ptr.hbm [resolvable:$true] %s41
      %s43 = sshll.u32 [#allocation7], 4
      %s44 = int_to_ptr.vmem [resolvable:$true] %s43
      %49 = dma.hbm_to_vmem [thread:$0]  %s42, 2048, %s44, [#allocation6], 128, 128, 8
    $region17: #{tpu_custom_call.1} parent=1 // pred_fallthru
      _
    // Predicated region
    $region18: #{tpu_custom_call.1} parent=1 // pred_check
      _
    $region19: #{tpu_custom_call.1} parent=1 // pred_check_branch
      %51 = sbr.rel (0) target = $region21
    $region20: #{tpu_custom_call.1} parent=1 // pred_region
      _
    $region21: #{tpu_custom_call.1} parent=1 // pred_fallthru
      _
    // Predicated region
    $region22: #{tpu_custom_call.1} parent=1 // pred_check
      _
    $region23: #{tpu_custom_call.1} parent=1 // pred_check_branch
      %53 = sbr.rel (0) target = $region25
    $region24: #{tpu_custom_call.1} parent=1 // pred_region
      %55 = dma.done [#allocation3], 128
    $region25: #{tpu_custom_call.1} parent=1 // pred_fallthru
      _
    // Predicated region
    $region26: #{tpu_custom_call.1} parent=1 // pred_check
      _
    $region27: #{tpu_custom_call.1} parent=1 // pred_check_branch
      %57 = sbr.rel (0) target = $region29
    $region28: #{tpu_custom_call.1} parent=1 // pred_region
      %59 = dma.done [#allocation6], 128
    $region29: #{tpu_custom_call.1} parent=1 // pred_fallthru
      _
    // Predicated region
    $region30: #{tpu_custom_call.1} parent=1 // pred_check
      _
    $region31: #{tpu_custom_call.1} parent=1 // pred_check_branch
      %61 = sbr.rel (0) target = $region33
    $region32: #{tpu_custom_call.1} parent=1 // pred_region
      %63 = dma.done [#allocation6], 2048
    $region33: #{tpu_custom_call.1} parent=1 // pred_fallthru
      _
    %v64 = vld [vmem:[#allocation2] sm:$0xff]
    %v65 = vld [vmem:[#allocation5] sm:$0x1f]
    %v66 = vld [vmem:[%s2] sm:$0x1]
    %v68 = vperm.slane %v66, 0
    %vm70 = vcmask 39936
    %v72 = vsel %vm70, %v64, 0
    %vm74 = vcmask 1044480
    %v76 = vsel %vm74, %v65, 0
    %78 = vmatpush.msra.mxu0 0.0
    %79 = vmatpush.msra.mxu0 0.0
    %80 = vmatpush.msra.mxu0 0.0
    %81 = vmatpush.msra.mxu0 0.0
    %82 = vmatpush.msra.mxu0 0.0
    %83 = vmatpush.msra.mxu0 0.0
    %84 = vmatpush.msra.mxu0 0.0
    %85 = vmatpush.msra.mxu0 0.0
    %86 = vmatpush.msra.mxu0 0.0
    %87 = vmatpush.msra.mxu0 0.0
    %88 = vmatpush.msra.mxu0 0.0
    %89 = vmatpush.msra.mxu0 0.0
    %90 = vmatpush.msra.mxu0 0.0
    %91 = vmatpush.msra.mxu0 0.0
    %92 = vmatpush.msra.mxu0 0.0
    %93 = vmatpush.msra.mxu0 %v76
    %94 = vmatmul.f32.gmra.mxu0 %v72
    %v95 = vpop.f32.mrf.mxu0
    %v96 = vadd.f32 %v68, %v95
    %97 = vdwg.mxu0
    %v98 = vmax.f32 %v96, 0.0
    %v99 = vld [vmem:[#allocation7] sm:$0xff]
    %v100 = vld [vmem:[#allocation7 + $0x8] sm:$0xff]
    %v101 = vld [vmem:[#allocation7 + $0x10] sm:$0xff]
    %v102 = vld [vmem:[#allocation7 + $0x18] sm:$0xff]
    %v103 = vld [vmem:[#allocation7 + $0x20] sm:$0xff]
    %v104 = vld [vmem:[#allocation7 + $0x28] sm:$0xff]
    %v105 = vld [vmem:[#allocation7 + $0x30] sm:$0xff]
    %v106 = vld [vmem:[#allocation7 + $0x38] sm:$0xff]
    %v107 = vld [vmem:[#allocation7 + $0x40] sm:$0xff]
    %v108 = vld [vmem:[#allocation7 + $0x48] sm:$0xff]
    %v109 = vld [vmem:[#allocation7 + $0x50] sm:$0xff]
    %v110 = vld [vmem:[#allocation7 + $0x58] sm:$0xff]
    %v111 = vld [vmem:[#allocation7 + $0x60] sm:$0xff]
    %v112 = vld [vmem:[#allocation7 + $0x68] sm:$0xff]
    %v113 = vld [vmem:[#allocation7 + $0x70] sm:$0xff]
    %v114 = vld [vmem:[#allocation7 + $0x78] sm:$0xff]
    %115 = vmatpush.msra.mxu0 %v114
    %116 = vmatpush.msra.mxu0 %v113
    %117 = vmatpush.msra.mxu0 %v112
    %118 = vmatpush.msra.mxu0 %v111
    %119 = vmatpush.msra.mxu0 %v110
    %120 = vmatpush.msra.mxu0 %v109
    %121 = vmatpush.msra.mxu0 %v108
    %122 = vmatpush.msra.mxu0 %v107
    %123 = vmatpush.msra.mxu0 %v106
    %124 = vmatpush.msra.mxu0 %v105
    %125 = vmatpush.msra.mxu0 %v104
    %126 = vmatpush.msra.mxu0 %v103
    %127 = vmatpush.msra.mxu0 %v102
    %128 = vmatpush.msra.mxu0 %v101
    %129 = vmatpush.msra.mxu0 %v100
    %130 = vmatpush.msra.mxu0 %v99
    %131 = vmatmul.f32.gmra.mxu0 %v98
    %v132 = vpop.f32.mrf.mxu0
    %v133 = vadd.f32 0.0, %v132
    %134 = vdwg.mxu0
    %v135 = vld [vmem:[%s4] sm:$0x1]
    %v137 = vperm.slane %v135, 0
    %v139 = vadd.f32 %v133, %v137
    %vm140 = vcmask 48128
    %141 = vst.msk [vmem:[#allocation8] sm:$0xff] %vm140, %v139
    // Predicated region
    $region34: #{tpu_custom_call.1} parent=1 // pred_check
      _
    $region35: #{tpu_custom_call.1} parent=1 // pred_check_branch
      %143 = sbr.rel (0) target = $region37
    $region36: #{tpu_custom_call.1} parent=1 // pred_region
      %145 = vsyncadd [#allocation4], 0
      %s147 = sshll.u32 [#allocation8], 4
      %s148 = int_to_ptr.vmem [resolvable:$true] %s147
      %s149 = sshll.u32 %s5, 4
      %s150 = int_to_ptr.hbm [resolvable:$true] %s149
      %152 = dma.vmem_to_hbm [thread:$0]  %s148, 128, %s150, [#allocation4]
    $region37: #{tpu_custom_call.1} parent=1 // pred_fallthru
      _
    // Predicated region
    $region38: #{tpu_custom_call.1} parent=1 // pred_check
      _
    $region39: #{tpu_custom_call.1} parent=1 // pred_check_branch
      %154 = sbr.rel (0) target = $region41
    $region40: #{tpu_custom_call.1} parent=1 // pred_region
      %156 = dma.done [#allocation4], 128
    $region41: #{tpu_custom_call.1} parent=1 // pred_fallthru
      _
    %157 = vsyncpa [#allocation3], 1
    %158 = vsyncpa [#allocation6], 1
    %159 = vsyncpa [#allocation4], 1

</llo_original>
